<compile_context>
chip_gen: v5e
topology: v5e:2x2
jax: 0.10.0
libtpu: 0.0.40
codegen_flags: <defaults>
</compile_context>

<pallas_src>
import functools

import jax
import jax.numpy as jnp
from jax.experimental import pallas as pl
from jax.experimental.pallas import tpu as pltpu

_LANE = 128
_SUBLANE = 8
# The fused-gather path is only taken when both tables comfortably fit in VMEM.
_FUSED_MAX_ROWS = 1024
_FUSED_MAX_DIM = 512


def _round_up(x, m):
    return ((x + m - 1) // m) * m


# ---------------------------------------------------------------------------
# Streaming kernel: embeddings already gathered, (B, D) -> (B/128, 128, D).
# ---------------------------------------------------------------------------
def _plan_tiles(batch, dim, itemsize,
                target_tile_bytes=2 * 1024 * 1024,
                max_tile_bytes=4 * 1024 * 1024):
    """Returns (tile_r [blocks of 128 rows], n_par, n_tiles, padded_batch)."""
    # VMEM bytes of one embedding row (lane dim pads to 128).
    row_bytes = _round_up(dim, _LANE) * itemsize
    rows_target = max(target_tile_bytes // row_bytes, _LANE)
    rows_cap = max(max_tile_bytes // row_bytes, _LANE)
    tile_b = min(rows_target, rows_cap, _round_up(batch, _LANE))
    tile_b = max((tile_b // _LANE) * _LANE, _LANE)
    total_tiles = pl.cdiv(batch, tile_b)
    n_par = 2 if total_tiles >= 2 else 1      # v7x: one partial sum per TensorCore
    n_tiles = pl.cdiv(total_tiles, n_par)
    b_pad = n_par * n_tiles * tile_b
    return tile_b // _LANE, n_par, n_tiles, b_pad


def _bpr_emb_kernel(u_ref, p_ref, n_ref, out_ref, acc_ref, *,
                    total_batch, n_tiles, needs_mask):
    c = pl.program_id(0)          # parallel partial-sum axis (megacore split)
    i = pl.program_id(1)          # reduction over batch tiles

    @pl.when(i == 0)
    def _():
        acc_ref[...] = jnp.zeros_like(acc_ref)

    # Fused score difference <u, p> - <u, n> == <u, p - n>, in f32.
    u = u_ref[...].astype(jnp.float32)
    diff = p_ref[...].astype(jnp.float32) - n_ref[...].astype(jnp.float32)
    d = jnp.sum(u * diff, axis=-1)                        # (tile_r, 128) lane-dense

    # -log(sigmoid(d)) == softplus(-d), numerically stable form.
    loss = jnp.maximum(-d, 0.0) + jnp.log1p(jnp.exp(-jnp.abs(d)))

    if needs_mask:    # statically compiled out when the batch is tile-aligned
        tile_r = d.shape[0]
        base = (c * n_tiles + i) * (tile_r * _LANE)
        row = (base
               + jax.lax.broadcasted_iota(jnp.int32, d.shape, 0) * _LANE
               + jax.lax.broadcasted_iota(jnp.int32, d.shape, 1))
        loss = jnp.where(row < total_batch, loss, 0.0)    # select, not multiply

    acc_ref[...] += loss          # per-row accumulation: no per-step XLU reduce

    @pl.when(i == n_tiles - 1)
    def _():
        psum = jnp.sum(acc_ref[...], keepdims=True)              # (1, 1)
        out_ref[...] = jnp.broadcast_to(psum, out_ref.shape)     # lane-dense store


def bpr_loss_pallas(u_emb, p_emb, n_emb, *, valid_batch=None, plan=None):
    """u_emb, p_emb, n_emb: (B, D) gathered embeddings. Returns scalar f32 loss.

    If the caller already padded the rows (preferred: pad the O(B) index
    vectors before the gather, not the embeddings), pass the true batch via
    `valid_batch` and the matching tile `plan`.
    """
    rows, dim = u_emb.shape
    valid = rows if valid_batch is None else valid_batch
    itemsize = u_emb.dtype.itemsize
    tile_r, n_par, n_tiles, b_pad = (
        _plan_tiles(rows, dim, itemsize) if plan is None else plan)

    if b_pad != rows:
        # Only hit when called directly with unpadded embeddings; callers that
        # own the gather pad the index vectors instead (see bpr_loss).
        pad = ((0, b_pad - rows), (0, 0))
        u_emb = jnp.pad(u_emb, pad)
        p_emb = jnp.pad(p_emb, pad)
        n_emb = jnp.pad(n_emb, pad)

    # Free contiguous reshape: rows become (row_blocks, 128) so per-row scores
    # occupy full 128-lane vregs inside the kernel.
    u3 = u_emb.reshape(b_pad // _LANE, _LANE, dim)
    p3 = p_emb.reshape(b_pad // _LANE, _LANE, dim)
    n3 = n_emb.reshape(b_pad // _LANE, _LANE, dim)

    needs_mask = b_pad != valid
    emb_spec = pl.BlockSpec((tile_r, _LANE, dim),
                            lambda c, i: (c * n_tiles + i, 0, 0))

    # 3 inputs x 2 pipeline buffers + accumulator + output, plus headroom.
    tile_bytes = tile_r * _LANE * _round_up(dim, _LANE) * itemsize
    vmem_need = 3 * 2 * tile_bytes + tile_r * _LANE * 4 + n_par * 8 * _LANE * 4
    vmem_limit = int(min(_round_up(vmem_need + (8 << 20), 1 << 20), 48 << 20))

    out = pl.pallas_call(
        functools.partial(_bpr_emb_kernel, total_batch=valid,
                          n_tiles=n_tiles, needs_mask=needs_mask),
        out_shape=jax.ShapeDtypeStruct((n_par * 8, _LANE), jnp.float32),
        grid_spec=pltpu.PrefetchScalarGridSpec(
            num_scalar_prefetch=0,
            grid=(n_par, n_tiles),
            in_specs=[emb_spec, emb_spec, emb_spec],
            out_specs=pl.BlockSpec((8, _LANE), lambda c, i: (c, 0)),
            scratch_shapes=[pltpu.VMEM((tile_r, _LANE), jnp.float32)],
        ),
        compiler_params=pltpu.CompilerParams(
            dimension_semantics=("parallel", "arbitrary"),
            vmem_limit_bytes=vmem_limit,
        ),
    )(u3, p3, n3)

    partials = out[0::8, 0]       # one replicated (8, 128) tile per parallel slice
    return jnp.sum(partials) / jnp.float32(valid)


# ---------------------------------------------------------------------------
# Fused-gather kernel: tables resident in VMEM, gather as one-hot MXU matmul.
# ---------------------------------------------------------------------------
def _bpr_fused_kernel(uid_ref, pid_ref, nid_ref, utab_ref, itab_ref,
                      out_ref, acc_ref, *, total_batch, n_tiles, needs_mask):
    c = pl.program_id(0)
    i = pl.program_id(1)
    tb = uid_ref.shape[0]

    @pl.when(i == 0)
    def _():
        acc_ref[...] = jnp.zeros_like(acc_ref)

    utab = utab_ref[...].astype(jnp.float32)          # (Nu, D), VMEM-resident
    itab = itab_ref[...].astype(jnp.float32)          # (Ni, D), VMEM-resident
    nu = utab.shape[0]
    ni = itab.shape[0]

    uid = uid_ref[...]                                # (tb, 1) int32
    pid = pid_ref[...]
    nid = nid_ref[...]

    # Row gather as one-hot matmuls on the (otherwise idle) MXU; HIGHEST
    # precision keeps the f32 table rows exact through the matmul.
    u_oh = (uid == jax.lax.broadcasted_iota(jnp.int32, (tb, nu), 1)
            ).astype(jnp.float32)
    it_iota = jax.lax.broadcasted_iota(jnp.int32, (tb, ni), 1)
    d_oh = ((pid == it_iota).astype(jnp.float32)
            - (nid == it_iota).astype(jnp.float32))   # one-hot(p) - one-hot(n)
    u = jnp.dot(u_oh, utab, preferred_element_type=jnp.float32,
                precision=jax.lax.Precision.HIGHEST)           # (tb, D)
    diff = jnp.dot(d_oh, itab, preferred_element_type=jnp.float32,
                   precision=jax.lax.Precision.HIGHEST)        # (tb, D) = p - n

    # NOTE: this path keeps a (tb, 1) loss layout; the one-hot/MXU work
    # dominates here and tables are demo/VMEM-scale, so EUP is not binding.
    d = jnp.sum(u * diff, axis=-1, keepdims=True)              # (tb, 1)
    loss = jnp.maximum(-d, 0.0) + jnp.log1p(jnp.exp(-jnp.abs(d)))

    if needs_mask:
        row = (c * n_tiles + i) * tb + jax.lax.broadcasted_iota(
            jnp.int32, (tb, 1), 0)
        loss = jnp.where(row < total_batch, loss, 0.0)

    acc_ref[...] += loss

    @pl.when(i == n_tiles - 1)
    def _():
        psum = jnp.sum(acc_ref[...], keepdims=True)
        out_ref[...] = jnp.broadcast_to(psum, out_ref.shape)


def _plan_fused(batch):
    tile_b = min(1024, _round_up(batch, _SUBLANE))
    total_tiles = pl.cdiv(batch, tile_b)
    n_par = 2 if total_tiles >= 2 else 1
    n_tiles = pl.cdiv(total_tiles, n_par)
    b_pad = n_par * n_tiles * tile_b
    return tile_b, n_par, n_tiles, b_pad


def _bpr_loss_fused(user_table, item_table, users, pos_items, neg_items):
    batch = users.shape[0]
    dim = user_table.shape[1]
    tile_b, n_par, n_tiles, b_pad = _plan_fused(batch)
    needs_mask = b_pad != batch

    def prep(idx):
        idx = idx.astype(jnp.int32)
        if b_pad != batch:
            idx = jnp.pad(idx, (0, b_pad - batch))   # O(B); masked in-kernel
        return idx.reshape(b_pad, 1)

    uid, pid, nid = prep(users), prep(pos_items), prep(neg_items)

    idx_spec = pl.BlockSpec((tile_b, 1), lambda c, i: (c * n_tiles + i, 0))
    utab_spec = pl.BlockSpec(user_table.shape, lambda c, i: (0, 0))  # resident
    itab_spec = pl.BlockSpec(item_table.shape, lambda c, i: (0, 0))  # resident

    itemsize = user_table.dtype.itemsize
    dpad = _round_up(dim, _LANE)
    tab_bytes = (user_table.shape[0] + item_table.shape[0]) * dpad * itemsize
    onehot_bytes = tile_b * (_round_up(user_table.shape[0], _LANE)
                             + _round_up(item_table.shape[0], _LANE)) * 4
    vmem_need = 2 * tab_bytes + 3 * 2 * tile_b * _LANE * 4 + 2 * onehot_bytes
    vmem_limit = int(min(_round_up(vmem_need + (8 << 20), 1 << 20), 48 << 20))

    out = pl.pallas_call(
        functools.partial(_bpr_fused_kernel, total_batch=batch,
                          n_tiles=n_tiles, needs_mask=needs_mask),
        out_shape=jax.ShapeDtypeStruct((n_par * 8, _LANE), jnp.float32),
        grid_spec=pltpu.PrefetchScalarGridSpec(
            num_scalar_prefetch=0,
            grid=(n_par, n_tiles),
            in_specs=[idx_spec, idx_spec, idx_spec, utab_spec, itab_spec],
            out_specs=pl.BlockSpec((8, _LANE), lambda c, i: (c, 0)),
            scratch_shapes=[pltpu.VMEM((tile_b, 1), jnp.float32)],
        ),
        compiler_params=pltpu.CompilerParams(
            dimension_semantics=("parallel", "arbitrary"),
            vmem_limit_bytes=vmem_limit,
        ),
    )(uid, pid, nid, user_table, item_table)

    partials = out[0::8, 0]
    return jnp.sum(partials) / jnp.float32(batch)


# ---------------------------------------------------------------------------
# Public entry point (BPRLoss.forward for the MF dot-product scorer).
# ---------------------------------------------------------------------------
def bpr_loss(user_emb_table, item_emb_table, users, pos_items, neg_items):
    nu, dim = user_emb_table.shape
    ni = item_emb_table.shape[0]

    if nu <= _FUSED_MAX_ROWS and ni <= _FUSED_MAX_ROWS and dim <= _FUSED_MAX_DIM:
        # Tables fit in VMEM: fuse the gather into the kernel; only int32
        # indices are streamed from HBM.
        return _bpr_loss_fused(user_emb_table, item_emb_table,
                               users, pos_items, neg_items)

    # Fallback: tables too large to keep resident; gather stays in XLA.
    # TODO(synk): scalar-prefetched indices + batched DMA row gather to drop
    #             the extra 3*B*D HBM write+read this jnp.take pass costs.
    batch = users.shape[0]
    plan = _plan_tiles(batch, dim, user_emb_table.dtype.itemsize)
    b_pad = plan[3]

    def pad_idx(idx):
        idx = idx.astype(jnp.int32)
        return jnp.pad(idx, (0, b_pad - batch)) if b_pad != batch else idx

    u = jnp.take(user_emb_table, pad_idx(users), axis=0)
    p = jnp.take(item_emb_table, pad_idx(pos_items), axis=0)
    n = jnp.take(item_emb_table, pad_idx(neg_items), axis=0)
    return bpr_loss_pallas(u, p, n, valid_batch=batch, plan=plan)


def bpr_loss_ref(user_emb_table, item_emb_table, users, pos_items, neg_items):
    u = jnp.take(user_emb_table, users, axis=0)
    p = jnp.take(item_emb_table, pos_items, axis=0)
    n = jnp.take(item_emb_table, neg_items, axis=0)
    x_ui = jnp.sum(u * p, axis=-1)
    x_uj = jnp.sum(u * n, axis=-1)
    return jnp.mean(-jnp.log(jax.nn.sigmoid(x_ui - x_uj)))


if __name__ == "__main__":
    key = jax.random.PRNGKey(0)
    k1, k2, k3, k4, k5, k6, k7, k8 = jax.random.split(key, 8)

    num_users, num_items, dim, batch = 32, 64, 32, 16

    # Deterministic synthetic "model" parameters (MF embedding tables), snapped
    # to bf16-representable values so the check is independent of the MXU
    # precision mode used by the in-kernel one-hot gather.
    user_emb_table = (0.1 * jax.random.normal(k1, (num_users, dim), jnp.float32)
                      ).astype(jnp.bfloat16).astype(jnp.float32)
    item_emb_table = (0.1 * jax.random.normal(k2, (num_items, dim), jnp.float32)
                      ).astype(jnp.bfloat16).astype(jnp.float32)

    users = jax.random.randint(k3, (batch,), 0, num_users)
    pos_items = jax.random.randint(k4, (batch,), 0, num_items)
    neg_items = jax.random.randint(k5, (batch,), 0, num_items)

    ref = bpr_loss_ref(user_emb_table, item_emb_table, users, pos_items, neg_items)

    # 1) Fused-gather path (tables resident in VMEM).
    out_fused = jax.block_until_ready(
        bpr_loss(user_emb_table, item_emb_table, users, pos_items, neg_items))
    assert jnp.allclose(out_fused, ref, atol=1e-5, rtol=1e-5), (out_fused, ref)

    # 2) Streaming path on pre-gathered embeddings (exercises pad + mask).
    u = jnp.take(user_emb_table, users, axis=0)
    p = jnp.take(item_emb_table, pos_items, axis=0)
    n = jnp.take(item_emb_table, neg_items, axis=0)
    out_emb = jax.block_until_ready(bpr_loss_pallas(u, p, n))
    assert jnp.allclose(out_emb, ref, atol=1e-5, rtol=1e-5), (out_emb, ref)

    # 3) Larger streaming case: multi-tile grid, parallel partial sums, mask.
    big_batch = 9000
    bu = jax.random.randint(k6, (big_batch,), 0, num_users)
    bp = jax.random.randint(k7, (big_batch,), 0, num_items)
    bn = jax.random.randint(k8, (big_batch,), 0, num_items)
    ub = jnp.take(user_emb_table, bu, axis=0)
    pb = jnp.take(item_emb_table, bp, axis=0)
    nb = jnp.take(item_emb_table, bn, axis=0)
    out_big = jax.block_until_ready(bpr_loss_pallas(ub, pb, nb))
    ref_big = bpr_loss_ref(user_emb_table, item_emb_table, bu, bp, bn)
    assert jnp.allclose(out_big, ref_big, atol=1e-5, rtol=1e-4), (out_big, ref_big)

    print("KERNEL_OK")
</pallas_src>

<mosaic_0001>
module attributes {stable_mosaic.version = 11 : i64} {
  func.func @_bpr_fused_kernel(%arg0: i32, %arg1: i32, %arg2: memref<16x1xi32, #tpu.memory_space<vmem>>, %arg3: memref<16x1xi32, #tpu.memory_space<vmem>>, %arg4: memref<16x1xi32, #tpu.memory_space<vmem>>, %arg5: memref<32x32xf32, #tpu.memory_space<vmem>>, %arg6: memref<64x32xf32, #tpu.memory_space<vmem>>, %arg7: memref<8x128xf32, #tpu.memory_space<vmem>>, %arg8: memref<16x1xf32, #tpu.memory_space<vmem>>) attributes {dimension_semantics = [#tpu.dimension_semantics<parallel>, #tpu.dimension_semantics<arbitrary>], iteration_bounds = array<i64: 1, 1>, scalar_prefetch = 0 : i64, scratch_operands = 1 : i64, tpu.core_type = #tpu.core_type<tc>, window_params = [{transform_indices = @transform_0, window_bounds = array<i64: 16, 1>}, {transform_indices = @transform_1, window_bounds = array<i64: 16, 1>}, {transform_indices = @transform_2, window_bounds = array<i64: 16, 1>}, {pipeline_mode = #tpu.pipeline_mode<synchronous>, transform_indices = @transform_3, window_bounds = array<i64: 32, 32>}, {pipeline_mode = #tpu.pipeline_mode<synchronous>, transform_indices = @transform_4, window_bounds = array<i64: 64, 32>}, {transform_indices = @transform_5, window_bounds = array<i64: 8, 128>}]} {
    %c0_i32 = arith.constant 0 : i32
    %0 = arith.cmpi eq, %arg1, %c0_i32 : i32
    %1 = arith.extui %0 : i1 to i32
    %c0_i32_0 = arith.constant 0 : i32
    %2 = arith.cmpi ne, %1, %c0_i32_0 : i32
    scf.if %2 {
      %cst_21 = arith.constant 0.000000e+00 : f32
      %44 = vector.broadcast %cst_21 : f32 to vector<16x1xf32>
      %c0_22 = arith.constant 0 : index
      %c0_23 = arith.constant 0 : index
      %45 = vector.load %arg8[%c0_22, %c0_23] : memref<16x1xf32, #tpu.memory_space<vmem>>, vector<16x1xf32>
      tpu.vector_store %arg8[%c0_22, %c0_23], %44 {strides = array<i32>} : memref<16x1xf32, #tpu.memory_space<vmem>>, vector<16x1xf32>,
    } else {
    }
    %c0 = arith.constant 0 : index
    %c0_1 = arith.constant 0 : index
    %3 = vector.load %arg5[%c0, %c0_1] : memref<32x32xf32, #tpu.memory_space<vmem>>, vector<32x32xf32>
    %c0_2 = arith.constant 0 : index
    %c0_3 = arith.constant 0 : index
    %4 = vector.load %arg6[%c0_2, %c0_3] : memref<64x32xf32, #tpu.memory_space<vmem>>, vector<64x32xf32>
    %c0_4 = arith.constant 0 : index
    %c0_5 = arith.constant 0 : index
    %5 = vector.load %arg2[%c0_4, %c0_5] : memref<16x1xi32, #tpu.memory_space<vmem>>, vector<16x1xi32>
    %c0_6 = arith.constant 0 : index
    %c0_7 = arith.constant 0 : index
    %6 = vector.load %arg3[%c0_6, %c0_7] : memref<16x1xi32, #tpu.memory_space<vmem>>, vector<16x1xi32>
    %c0_8 = arith.constant 0 : index
    %c0_9 = arith.constant 0 : index
    %7 = vector.load %arg4[%c0_8, %c0_9] : memref<16x1xi32, #tpu.memory_space<vmem>>, vector<16x1xi32>
    %8 = tpu.iota {dimensions = array<i32: 1>} : vector<16x32xi32>
    %9 = vector.broadcast %5 : vector<16x1xi32> to vector<16x32xi32>
    %10 = arith.cmpi eq, %9, %8 : vector<16x32xi32>
    %11 = arith.extui %10 : vector<16x32xi1> to vector<16x32xi32>
    %12 = arith.sitofp %11 : vector<16x32xi32> to vector<16x32xf32>
    %13 = tpu.iota {dimensions = array<i32: 1>} : vector<16x64xi32>
    %14 = vector.broadcast %6 : vector<16x1xi32> to vector<16x64xi32>
    %15 = arith.cmpi eq, %14, %13 : vector<16x64xi32>
    %16 = arith.extui %15 : vector<16x64xi1> to vector<16x64xi32>
    %17 = arith.sitofp %16 : vector<16x64xi32> to vector<16x64xf32>
    %18 = vector.broadcast %7 : vector<16x1xi32> to vector<16x64xi32>
    %19 = arith.cmpi eq, %18, %13 : vector<16x64xi32>
    %20 = arith.extui %19 : vector<16x64xi1> to vector<16x64xi32>
    %21 = arith.sitofp %20 : vector<16x64xi32> to vector<16x64xf32>
    %22 = arith.subf %17, %21 : vector<16x64xf32>
    %cst = arith.constant dense<0.000000e+00> : vector<16x32xf32>
    %23 = tpu.matmul %12, %3, %cst {dimension_numbers = #tpu.dot_dimension_numbers<[1], [0], [0], [1], [0, 0, 1, 1], [], []>, precision = #tpu.contract_precision<fp32>} : vector<16x32xf32>, vector<32x32xf32>, vector<16x32xf32> -> vector<16x32xf32>
    %cst_10 = arith.constant dense<0.000000e+00> : vector<16x32xf32>
    %24 = tpu.matmul %22, %4, %cst_10 {dimension_numbers = #tpu.dot_dimension_numbers<[1], [0], [0], [1], [0, 0, 1, 1], [], []>, precision = #tpu.contract_precision<fp32>} : vector<16x64xf32>, vector<64x32xf32>, vector<16x32xf32> -> vector<16x32xf32>
    %25 = arith.mulf %23, %24 : vector<16x32xf32>
    %cst_11 = arith.constant dense<0.000000e+00> : vector<16xf32>
    %26 = vector.multi_reduction <add>, %25, %cst_11 [1] : vector<16x32xf32> to vector<16xf32>
    %27 = vector.shape_cast %26 : vector<16xf32> to vector<16x1xf32>
    %cst_12 = arith.constant 0.000000e+00 : f32
    %28 = vector.broadcast %cst_12 : f32 to vector<16x1xf32>
    %29 = arith.subf %28, %27 : vector<16x1xf32>
    %cst_13 = arith.constant 0.000000e+00 : f32
    %30 = vector.broadcast %cst_13 : f32 to vector<16x1xf32>
    %31 = arith.maximumf %29, %30 : vector<16x1xf32>
    %32 = math.absf %27 : vector<16x1xf32>
    %cst_14 = arith.constant 0.000000e+00 : f32
    %33 = vector.broadcast %cst_14 : f32 to vector<16x1xf32>
    %34 = arith.subf %33, %32 : vector<16x1xf32>
    %35 = math.exp %34 : vector<16x1xf32>
    %36 = math.log1p %35 : vector<16x1xf32>
    %37 = arith.addf %31, %36 : vector<16x1xf32>
    %c0_15 = arith.constant 0 : index
    %c0_16 = arith.constant 0 : index
    %38 = vector.load %arg8[%c0_15, %c0_16] : memref<16x1xf32, #tpu.memory_space<vmem>>, vector<16x1xf32>
    %39 = arith.addf %38, %37 : vector<16x1xf32>
    %c0_17 = arith.constant 0 : index
    %c0_18 = arith.constant 0 : index
    %40 = vector.load %arg8[%c0_17, %c0_18] : memref<16x1xf32, #tpu.memory_space<vmem>>, vector<16x1xf32>
    tpu.vector_store %arg8[%c0_17, %c0_18], %39 {strides = array<i32>} : memref<16x1xf32, #tpu.memory_space<vmem>>, vector<16x1xf32>,
    %c0_i32_19 = arith.constant 0 : i32
    %41 = arith.cmpi eq, %arg1, %c0_i32_19 : i32
    %42 = arith.extui %41 : i1 to i32
    %c0_i32_20 = arith.constant 0 : i32
    %43 = arith.cmpi ne, %42, %c0_i32_20 : i32
    scf.if %43 {
      %c0_21 = arith.constant 0 : index
      %c0_22 = arith.constant 0 : index
      %44 = vector.load %arg8[%c0_21, %c0_22] : memref<16x1xf32, #tpu.memory_space<vmem>>, vector<16x1xf32>
      %45 = vector.shape_cast %44 : vector<16x1xf32> to vector<1x16x1xf32>
      %cst_23 = arith.constant dense<0.000000e+00> : vector<1xf32>
      %46 = vector.multi_reduction <add>, %45, %cst_23 [1, 2] : vector<1x16x1xf32> to vector<1xf32>
      %47 = vector.shape_cast %46 : vector<1xf32> to vector<1x1x1xf32>
      %48 = vector.extract %47[0, 0, 0] : f32 from vector<1x1x1xf32>
      %49 = vector.broadcast %48 : f32 to vector<1x1xf32>
      %50 = vector.shape_cast %49 : vector<1x1xf32> to vector<1x1xf32>
      %51 = vector.broadcast %50 : vector<1x1xf32> to vector<8x128xf32>
      %c0_24 = arith.constant 0 : index
      %c0_25 = arith.constant 0 : index
      %52 = vector.load %arg7[%c0_24, %c0_25] : memref<8x128xf32, #tpu.memory_space<vmem>>, vector<8x128xf32>
      tpu.vector_store %arg7[%c0_24, %c0_25], %51 {strides = array<i32>} : memref<8x128xf32, #tpu.memory_space<vmem>>, vector<8x128xf32>,
    } else {
    }
    return
  }
  func.func @transform_0(%arg0: i32, %arg1: i32) -> (i32, i32) {
    %c1_i32 = arith.constant 1 : i32
    %0 = arith.muli %arg0, %c1_i32 : i32
    %1 = arith.addi %0, %arg1 : i32
    %c0_i32 = arith.constant 0 : i32
    %c0_i32_0 = arith.constant 0 : i32
    return %1, %c0_i32 : i32, i32
  }
  func.func @transform_1(%arg0: i32, %arg1: i32) -> (i32, i32) {
    %c1_i32 = arith.constant 1 : i32
    %0 = arith.muli %arg0, %c1_i32 : i32
    %1 = arith.addi %0, %arg1 : i32
    %c0_i32 = arith.constant 0 : i32
    %c0_i32_0 = arith.constant 0 : i32
    return %1, %c0_i32 : i32, i32
  }
  func.func @transform_2(%arg0: i32, %arg1: i32) -> (i32, i32) {
    %c1_i32 = arith.constant 1 : i32
    %0 = arith.muli %arg0, %c1_i32 : i32
    %1 = arith.addi %0, %arg1 : i32
    %c0_i32 = arith.constant 0 : i32
    %c0_i32_0 = arith.constant 0 : i32
    return %1, %c0_i32 : i32, i32
  }
  func.func @transform_3(%arg0: i32, %arg1: i32) -> (i32, i32) {
    %c0_i32 = arith.constant 0 : i32
    %c0_i32_0 = arith.constant 0 : i32
    %c0_i32_1 = arith.constant 0 : i32
    return %c0_i32, %c0_i32_0 : i32, i32
  }
  func.func @transform_4(%arg0: i32, %arg1: i32) -> (i32, i32) {
    %c0_i32 = arith.constant 0 : i32
    %c0_i32_0 = arith.constant 0 : i32
    %c0_i32_1 = arith.constant 0 : i32
    return %c0_i32, %c0_i32_0 : i32, i32
  }
  func.func @transform_5(%arg0: i32, %arg1: i32) -> (i32, i32) {
    %c0_i32 = arith.constant 0 : i32
    %c0_i32_0 = arith.constant 0 : i32
    return %arg0, %c0_i32 : i32, i32
  }
}

</mosaic_0001>

<llo_original>
// kernel: tpu_custom_call.1
$region0: #{tpu_custom_call.1}
  #allocation0 [shape = 'u32[]', space=smem, size = 0x4, offset = 0x4, fixed_abs, tag = 'smem constant byte address 0x4 - core index']
  #allocation1 [shape = 'u32[72,128]{1,0:T(1,128)}', space=vmem, size = 0x9000, scoped, tag = 'internal scratch']
  #allocation2 [shape = 'f32[16,1]{1,0:T(8,128)}', space=vmem, size = 0x2000, scoped, tag = 'scratch operand']
  %s0 = inlined_call_operand.vmem [shape: s32[16,1], index: 0, kind: input, shape index: {}]
  %s1 = inlined_call_operand.vmem [shape: s32[16,1], index: 1, kind: input, shape index: {}]
  %s2 = inlined_call_operand.vmem [shape: s32[16,1], index: 2, kind: input, shape index: {}]
  %s3 = inlined_call_operand.vmem [shape: f32[32,32], index: 3, kind: input, shape index: {}]
  %s4 = inlined_call_operand.vmem [shape: f32[64,32], index: 4, kind: input, shape index: {}]
  %s5 = inlined_call_operand.hbm [shape: f32[8,128], index: 5, kind: output, shape index: {}]
  %s6 = sld [smem:[#allocation0]]
  $region38: #{tpu_custom_call.1} parent=0
    _
  %s8 = ssub.s32 1, %s6
  %s9 = scalar_select 0, %s8, %s6
  $region1: #{tpu_custom_call.1} parent=0
    #allocation3 [shape = 'u8[4096]{0}', space=vmem, size = 0x1000, scoped, tag = 'output window, operand 0, single buffered']
    #allocation4 [shape = 's32[1]{0}', space=sflag, size = 0x4, scoped, tag = 'scoped memory for tpu_custom_call.1']
    %10 = vsyncpa [#allocation4], 0
    // Predicated region
    $region2: #{tpu_custom_call.1} parent=1 // pred_check
      _
    $region3: #{tpu_custom_call.1} parent=1 // pred_check_branch
      %12 = sbr.rel (0) target = $region5
    $region4: #{tpu_custom_call.1} parent=1 // pred_region
      %s13 = sadd.s32 0, 0
      %s14 = smul.u32 2, %s13
      %p15 = scmp.lt.s32.totalorder %s14, 1
      %s16 = scalar_select %p15, %s14, 1
      %s17 = smul.addr %s16, 8
      %s18 = scalar_lea.vmem %s0, %s17
      %s19 = sadd.s32 0, 0
      %s20 = smul.u32 2, %s19
    $region5: #{tpu_custom_call.1} parent=1 // pred_fallthru
      _
    // Predicated region
    $region6: #{tpu_custom_call.1} parent=1 // pred_check
      _
    $region7: #{tpu_custom_call.1} parent=1 // pred_check_branch
      %22 = sbr.rel (0) target = $region9
    $region8: #{tpu_custom_call.1} parent=1 // pred_region
      %s23 = sadd.s32 0, 0
      %s24 = smul.u32 2, %s23
      %p25 = scmp.lt.s32.totalorder %s24, 1
      %s26 = scalar_select %p25, %s24, 1
      %s27 = smul.addr %s26, 8
      %s28 = scalar_lea.vmem %s1, %s27
      %s29 = sadd.s32 0, 0
      %s30 = smul.u32 2, %s29
    $region9: #{tpu_custom_call.1} parent=1 // pred_fallthru
      _
    // Predicated region
    $region10: #{tpu_custom_call.1} parent=1 // pred_check
      _
    $region11: #{tpu_custom_call.1} parent=1 // pred_check_branch
      %32 = sbr.rel (0) target = $region13
    $region12: #{tpu_custom_call.1} parent=1 // pred_region
      %s33 = sadd.s32 0, 0
      %s34 = smul.u32 2, %s33
      %p35 = scmp.lt.s32.totalorder %s34, 1
      %s36 = scalar_select %p35, %s34, 1
      %s37 = smul.addr %s36, 8
      %s38 = scalar_lea.vmem %s2, %s37
      %s39 = sadd.s32 0, 0
      %s40 = smul.u32 2, %s39
    $region13: #{tpu_custom_call.1} parent=1 // pred_fallthru
      _
    // Predicated region
    $region14: #{tpu_custom_call.1} parent=1 // pred_check
      _
    $region15: #{tpu_custom_call.1} parent=1 // pred_check_branch
      %42 = sbr.rel (0) target = $region17
    $region16: #{tpu_custom_call.1} parent=1 // pred_region
      _
    $region17: #{tpu_custom_call.1} parent=1 // pred_fallthru
      _
    // Predicated region
    $region18: #{tpu_custom_call.1} parent=1 // pred_check
      _
    $region19: #{tpu_custom_call.1} parent=1 // pred_check_branch
      %44 = sbr.rel (0) target = $region21
    $region20: #{tpu_custom_call.1} parent=1 // pred_region
      _
    $region21: #{tpu_custom_call.1} parent=1 // pred_fallthru
      _
    %s45 = sadd.s32 0, 0
    %s46 = smul.u32 2, %s45
    %p47 = scmp.lt.s32.totalorder %s46, 1
    %s48 = scalar_select %p47, %s46, 1
    %s49 = smul.addr %s48, 8
    %s50 = scalar_lea.vmem %s0, %s49
    %s51 = sadd.s32 0, 0
    %s52 = smul.u32 2, %s51
    %p53 = scmp.lt.s32.totalorder %s52, 1
    %s54 = scalar_select %p53, %s52, 1
    %s55 = smul.addr %s54, 8
    %s56 = scalar_lea.vmem %s1, %s55
    %s57 = sadd.s32 0, 0
    %s58 = smul.u32 2, %s57
    %p59 = scmp.lt.s32.totalorder %s58, 1
    %s60 = scalar_select %p59, %s58, 1
    %s61 = smul.addr %s60, 8
    %s62 = scalar_lea.vmem %s2, %s61
    %s63 = sadd.s32 0, 0
    %s64 = smul.u32 2, %s63
    %p65 = scmp.lt.s32.totalorder %s64, 1
    %s66 = scalar_select %p65, %s64, 1
    %s67 = smul.addr %s66, 8
    %s68 = scalar_lea.vmem %s0, %s67
    %s69 = sadd.s32 0, 0
    %s70 = smul.u32 2, %s69
    %s71 = sadd.s32 0, 0
    %s72 = smul.u32 2, %s71
    %p73 = scmp.lt.s32.totalorder %s72, 1
    %s74 = scalar_select %p73, %s72, 1
    %s75 = smul.addr %s74, 8
    %s76 = scalar_lea.vmem %s1, %s75
    %s77 = sadd.s32 0, 0
    %s78 = smul.u32 2, %s77
    %s79 = sadd.s32 0, 0
    %s80 = smul.u32 2, %s79
    %p81 = scmp.lt.s32.totalorder %s80, 1
    %s82 = scalar_select %p81, %s80, 1
    %s83 = smul.addr %s82, 8
    %s84 = scalar_lea.vmem %s2, %s83
    %s85 = sadd.s32 0, 0
    %s86 = smul.u32 2, %s85
    %p87 = scmp.eq.s32.totalorder 0, 0
    // Predicated region
    $region22: #{tpu_custom_call.1} parent=1 // pred_check
      %p88 = pneg %p87
    $region23: #{tpu_custom_call.1} parent=1 // pred_check_branch
      %90 = sbr.rel (%p88) target = $region25
    $region24: #{tpu_custom_call.1} parent=1 // pred_region
      %vm91 = vcmask 7168
      %92 = vst.msk [vmem:[#allocation2] sm:$0xff] %vm91, 0.0
      %93 = vst.msk [vmem:[#allocation2 + $0x8] sm:$0xff] %vm91, 0.0
    $region25: #{tpu_custom_call.1} parent=1 // pred_fallthru
      _
    %v94 = vld [vmem:[%s3] sm:$0xff]
    %v95 = vld [vmem:[%s3 + $0x8] sm:$0xff]
    %v96 = vld [vmem:[%s3 + $0x10] sm:$0xff]
    %v97 = vld [vmem:[%s3 + $0x18] sm:$0xff]
    %v98 = vld [vmem:[%s4] sm:$0xff]
    %v99 = vld [vmem:[%s4 + $0x8] sm:$0xff]
    %v100 = vld [vmem:[%s4 + $0x10] sm:$0xff]
    %v101 = vld [vmem:[%s4 + $0x18] sm:$0xff]
    %v102 = vld [vmem:[%s4 + $0x20] sm:$0xff]
    %v103 = vld [vmem:[%s4 + $0x28] sm:$0xff]
    %v104 = vld [vmem:[%s4 + $0x30] sm:$0xff]
    %v105 = vld [vmem:[%s4 + $0x38] sm:$0xff]
    %v106 = vld [vmem:[%s68] sm:$0xff]
    %v107 = vld [vmem:[%s68 + $0x8] sm:$0xff]
    %v108 = vld [vmem:[%s76] sm:$0xff]
    %v109 = vld [vmem:[%s76 + $0x8] sm:$0xff]
    %v110 = vld [vmem:[%s84] sm:$0xff]
    %v111 = vld [vmem:[%s84 + $0x8] sm:$0xff]
    %v112 = vlaneseq
    %v113 = vand.u32 %v112, 127
    %114 = vset.pattern.permute.xlu0 0
    %115 = vperm.xlu0 %114, %v106
    %v116 = vpop.permute.xlu0 %115
    %117 = vset.pattern.permute.xlu0 0
    %118 = vperm.xlu0 %117, %v107
    %v119 = vpop.permute.xlu0 %118
    %vm120 = vcmp.eq.s32.totalorder %v116, %v113
    %vm121 = vcmp.eq.s32.totalorder %v119, %v113
    %v122 = vsel %vm120, 1, 0
    %v123 = vsel %vm121, 1, 0
    %v124 = vcvt.s32.f32 %v122
    %v125 = vcvt.s32.f32 %v123
    %126 = vset.pattern.permute.xlu0 0
    %127 = vperm.xlu0 %126, %v108
    %v128 = vpop.permute.xlu0 %127
    %129 = vset.pattern.permute.xlu0 0
    %130 = vperm.xlu0 %129, %v109
    %v131 = vpop.permute.xlu0 %130
    %vm132 = vcmp.eq.s32.totalorder %v128, %v113
    %vm133 = vcmp.eq.s32.totalorder %v131, %v113
    %v134 = vsel %vm132, 1, 0
    %v135 = vsel %vm133, 1, 0
    %v136 = vcvt.s32.f32 %v134
    %v137 = vcvt.s32.f32 %v135
    %138 = vset.pattern.permute.xlu0 0
    %139 = vperm.xlu0 %138, %v110
    %v140 = vpop.permute.xlu0 %139
    %141 = vset.pattern.permute.xlu0 0
    %142 = vperm.xlu0 %141, %v111
    %v143 = vpop.permute.xlu0 %142
    %vm144 = vcmp.eq.s32.totalorder %v140, %v113
    %vm145 = vcmp.eq.s32.totalorder %v143, %v113
    %v146 = vsel %vm144, 1, 0
    %v147 = vsel %vm145, 1, 0
    %v148 = vcvt.s32.f32 %v146
    %v149 = vcvt.s32.f32 %v147
    %v150 = vsub.f32 %v136, %v148
    %v151 = vsub.f32 %v137, %v149
    %vm152 = vcmask 261120
    %v154 = vsel %vm152, %v124, 0
    %v157 = vsel %vm152, %v125, 0
    %159 = vmatpush.msra.mxu0 0.0
    %160 = vmatpush.msra.mxu0 0.0
    %161 = vmatpush.msra.mxu0 0.0
    %162 = vmatpush.msra.mxu0 0.0
    %163 = vmatpush.msra.mxu0 0.0
    %164 = vmatpush.msra.mxu0 0.0
    %165 = vmatpush.msra.mxu0 0.0
    %166 = vmatpush.msra.mxu0 0.0
    %167 = vmatpush.msra.mxu0 0.0
    %168 = vmatpush.msra.mxu0 0.0
    %169 = vmatpush.msra.mxu0 0.0
    %170 = vmatpush.msra.mxu0 0.0
    %v171 = vand.u32 %v97, 4294901760
    %172 = vmatpush.msra.mxu0 %v171
    %v173 = vand.u32 %v96, 4294901760
    %174 = vmatpush.msra.mxu0 %v173
    %v175 = vand.u32 %v95, 4294901760
    %176 = vmatpush.msra.mxu0 %v175
    %v177 = vand.u32 %v94, 4294901760
    %178 = vmatpush.msra.mxu0 %v177
    %v179 = vand.u32 %v154, 4294901760
    %v180 = vsub.f32 %v154, %v179
    %v181 = vand.u32 %v180, 4294901760
    %v182 = vsub.f32 %v180, %v181
    %v183 = vand.u32 %v182, 4294901760
    %184 = vmatmul.f32.gmra.mxu0 %v183
    %v185 = vpop.f32.mrf.mxu0
    %v186 = vadd.f32 0.0, %v185
    %v187 = vand.u32 %v157, 4294901760
    %v188 = vsub.f32 %v157, %v187
    %v189 = vand.u32 %v188, 4294901760
    %v190 = vsub.f32 %v188, %v189
    %v191 = vand.u32 %v190, 4294901760
    %192 = vmatmul.f32.gmra.mxu0 %v191
    %v193 = vpop.f32.mrf.mxu0
    %v194 = vadd.f32 0.0, %v193
    %195 = vdwg.mxu0
    %196 = vmatpush.msra.mxu0 0.0
    %197 = vmatpush.msra.mxu0 0.0
    %198 = vmatpush.msra.mxu0 0.0
    %199 = vmatpush.msra.mxu0 0.0
    %200 = vmatpush.msra.mxu0 0.0
    %201 = vmatpush.msra.mxu0 0.0
    %202 = vmatpush.msra.mxu0 0.0
    %203 = vmatpush.msra.mxu0 0.0
    %204 = vmatpush.msra.mxu0 0.0
    %205 = vmatpush.msra.mxu0 0.0
    %206 = vmatpush.msra.mxu0 0.0
    %207 = vmatpush.msra.mxu0 0.0
    %v208 = vand.u32 %v97, 4294901760
    %v209 = vsub.f32 %v97, %v208
    %v210 = vand.u32 %v209, 4294901760
    %v211 = vsub.f32 %v209, %v210
    %v212 = vand.u32 %v211, 4294901760
    %213 = vmatpush.msra.mxu0 %v212
    %v214 = vand.u32 %v96, 4294901760
    %v215 = vsub.f32 %v96, %v214
    %v216 = vand.u32 %v215, 4294901760
    %v217 = vsub.f32 %v215, %v216
    %v218 = vand.u32 %v217, 4294901760
    %219 = vmatpush.msra.mxu0 %v218
    %v220 = vand.u32 %v95, 4294901760
    %v221 = vsub.f32 %v95, %v220
    %v222 = vand.u32 %v221, 4294901760
    %v223 = vsub.f32 %v221, %v222
    %v224 = vand.u32 %v223, 4294901760
    %225 = vmatpush.msra.mxu0 %v224
    %v226 = vand.u32 %v94, 4294901760
    %v227 = vsub.f32 %v94, %v226
    %v228 = vand.u32 %v227, 4294901760
    %v229 = vsub.f32 %v227, %v228
    %v230 = vand.u32 %v229, 4294901760
    %231 = vmatpush.msra.mxu0 %v230
    %v232 = vand.u32 %v154, 4294901760
    %233 = vmatmul.f32.gmra.mxu0 %v232
    %v234 = vpop.f32.mrf.mxu0
    %v235 = vadd.f32 %v186, %v234
    %v236 = vand.u32 %v157, 4294901760
    %237 = vmatmul.f32.gmra.mxu0 %v236
    %v238 = vpop.f32.mrf.mxu0
    %v239 = vadd.f32 %v194, %v238
    %240 = vdwg.mxu0
    %241 = vmatpush.msra.mxu0 0.0
    %242 = vmatpush.msra.mxu0 0.0
    %243 = vmatpush.msra.mxu0 0.0
    %244 = vmatpush.msra.mxu0 0.0
    %245 = vmatpush.msra.mxu0 0.0
    %246 = vmatpush.msra.mxu0 0.0
    %247 = vmatpush.msra.mxu0 0.0
    %248 = vmatpush.msra.mxu0 0.0
    %249 = vmatpush.msra.mxu0 0.0
    %250 = vmatpush.msra.mxu0 0.0
    %251 = vmatpush.msra.mxu0 0.0
    %252 = vmatpush.msra.mxu0 0.0
    %v253 = vand.u32 %v97, 4294901760
    %v254 = vsub.f32 %v97, %v253
    %255 = vmatpush.msra.mxu0 %v254
    %v256 = vand.u32 %v96, 4294901760
    %v257 = vsub.f32 %v96, %v256
    %258 = vmatpush.msra.mxu0 %v257
    %v259 = vand.u32 %v95, 4294901760
    %v260 = vsub.f32 %v95, %v259
    %261 = vmatpush.msra.mxu0 %v260
    %v262 = vand.u32 %v94, 4294901760
    %v263 = vsub.f32 %v94, %v262
    %264 = vmatpush.msra.mxu0 %v263
    %v265 = vand.u32 %v154, 4294901760
    %v266 = vsub.f32 %v154, %v265
    %267 = vmatmul.f32.gmra.mxu0 %v266
    %v268 = vpop.f32.mrf.mxu0
    %v269 = vadd.f32 %v235, %v268
    %v270 = vand.u32 %v157, 4294901760
    %v271 = vsub.f32 %v157, %v270
    %272 = vmatmul.f32.gmra.mxu0 %v271
    %v273 = vpop.f32.mrf.mxu0
    %v274 = vadd.f32 %v239, %v273
    %275 = vdwg.mxu0
    %276 = vmatpush.msra.mxu0 0.0
    %277 = vmatpush.msra.mxu0 0.0
    %278 = vmatpush.msra.mxu0 0.0
    %279 = vmatpush.msra.mxu0 0.0
    %280 = vmatpush.msra.mxu0 0.0
    %281 = vmatpush.msra.mxu0 0.0
    %282 = vmatpush.msra.mxu0 0.0
    %283 = vmatpush.msra.mxu0 0.0
    %284 = vmatpush.msra.mxu0 0.0
    %285 = vmatpush.msra.mxu0 0.0
    %286 = vmatpush.msra.mxu0 0.0
    %287 = vmatpush.msra.mxu0 0.0
    %v288 = vand.u32 %v97, 4294901760
    %289 = vmatpush.msra.mxu0 %v288
    %v290 = vand.u32 %v96, 4294901760
    %291 = vmatpush.msra.mxu0 %v290
    %v292 = vand.u32 %v95, 4294901760
    %293 = vmatpush.msra.mxu0 %v292
    %v294 = vand.u32 %v94, 4294901760
    %295 = vmatpush.msra.mxu0 %v294
    %v296 = vand.u32 %v154, 4294901760
    %v297 = vsub.f32 %v154, %v296
    %v298 = vand.u32 %v297, 4294901760
    %299 = vmatmul.f32.gmra.mxu0 %v298
    %v300 = vpop.f32.mrf.mxu0
    %v301 = vadd.f32 %v269, %v300
    %v302 = vand.u32 %v157, 4294901760
    %v303 = vsub.f32 %v157, %v302
    %v304 = vand.u32 %v303, 4294901760
    %305 = vmatmul.f32.gmra.mxu0 %v304
    %v306 = vpop.f32.mrf.mxu0
    %v307 = vadd.f32 %v274, %v306
    %308 = vdwg.mxu0
    %309 = vmatpush.msra.mxu0 0.0
    %310 = vmatpush.msra.mxu0 0.0
    %311 = vmatpush.msra.mxu0 0.0
    %312 = vmatpush.msra.mxu0 0.0
    %313 = vmatpush.msra.mxu0 0.0
    %314 = vmatpush.msra.mxu0 0.0
    %315 = vmatpush.msra.mxu0 0.0
    %316 = vmatpush.msra.mxu0 0.0
    %317 = vmatpush.msra.mxu0 0.0
    %318 = vmatpush.msra.mxu0 0.0
    %319 = vmatpush.msra.mxu0 0.0
    %320 = vmatpush.msra.mxu0 0.0
    %v321 = vand.u32 %v97, 4294901760
    %v322 = vsub.f32 %v97, %v321
    %v323 = vand.u32 %v322, 4294901760
    %324 = vmatpush.msra.mxu0 %v323
    %v325 = vand.u32 %v96, 4294901760
    %v326 = vsub.f32 %v96, %v325
    %v327 = vand.u32 %v326, 4294901760
    %328 = vmatpush.msra.mxu0 %v327
    %v329 = vand.u32 %v95, 4294901760
    %v330 = vsub.f32 %v95, %v329
    %v331 = vand.u32 %v330, 4294901760
    %332 = vmatpush.msra.mxu0 %v331
    %v333 = vand.u32 %v94, 4294901760
    %v334 = vsub.f32 %v94, %v333
    %v335 = vand.u32 %v334, 4294901760
    %336 = vmatpush.msra.mxu0 %v335
    %v337 = vand.u32 %v154, 4294901760
    %338 = vmatmul.f32.gmra.mxu0 %v337
    %v339 = vpop.f32.mrf.mxu0
    %v340 = vadd.f32 %v301, %v339
    %v341 = vand.u32 %v157, 4294901760
    %342 = vmatmul.f32.gmra.mxu0 %v341
    %v343 = vpop.f32.mrf.mxu0
    %v344 = vadd.f32 %v307, %v343
    %345 = vdwg.mxu0
    %346 = vmatpush.msra.mxu0 0.0
    %347 = vmatpush.msra.mxu0 0.0
    %348 = vmatpush.msra.mxu0 0.0
    %349 = vmatpush.msra.mxu0 0.0
    %350 = vmatpush.msra.mxu0 0.0
    %351 = vmatpush.msra.mxu0 0.0
    %352 = vmatpush.msra.mxu0 0.0
    %353 = vmatpush.msra.mxu0 0.0
    %354 = vmatpush.msra.mxu0 0.0
    %355 = vmatpush.msra.mxu0 0.0
    %356 = vmatpush.msra.mxu0 0.0
    %357 = vmatpush.msra.mxu0 0.0
    %v358 = vand.u32 %v97, 4294901760
    %359 = vmatpush.msra.mxu0 %v358
    %v360 = vand.u32 %v96, 4294901760
    %361 = vmatpush.msra.mxu0 %v360
    %v362 = vand.u32 %v95, 4294901760
    %363 = vmatpush.msra.mxu0 %v362
    %v364 = vand.u32 %v94, 4294901760
    %365 = vmatpush.msra.mxu0 %v364
    %v366 = vand.u32 %v154, 4294901760
    %367 = vmatmul.f32.gmra.mxu0 %v366
    %v368 = vpop.f32.mrf.mxu0
    %v369 = vadd.f32 %v340, %v368
    %v370 = vand.u32 %v157, 4294901760
    %371 = vmatmul.f32.gmra.mxu0 %v370
    %v372 = vpop.f32.mrf.mxu0
    %v373 = vadd.f32 %v344, %v372
    %374 = vdwg.mxu0
    %vm375 = vcmask 523264
    %v377 = vsel %vm375, %v150, 0
    %v380 = vsel %vm375, %v151, 0
    %382 = vmatpush.msra.mxu0 0.0
    %383 = vmatpush.msra.mxu0 0.0
    %384 = vmatpush.msra.mxu0 0.0
    %385 = vmatpush.msra.mxu0 0.0
    %386 = vmatpush.msra.mxu0 0.0
    %387 = vmatpush.msra.mxu0 0.0
    %388 = vmatpush.msra.mxu0 0.0
    %389 = vmatpush.msra.mxu0 0.0
    %v390 = vand.u32 %v105, 4294901760
    %391 = vmatpush.msra.mxu0 %v390
    %v392 = vand.u32 %v104, 4294901760
    %393 = vmatpush.msra.mxu0 %v392
    %v394 = vand.u32 %v103, 4294901760
    %395 = vmatpush.msra.mxu0 %v394
    %v396 = vand.u32 %v102, 4294901760
    %397 = vmatpush.msra.mxu0 %v396
    %v398 = vand.u32 %v101, 4294901760
    %399 = vmatpush.msra.mxu0 %v398
    %v400 = vand.u32 %v100, 4294901760
    %401 = vmatpush.msra.mxu0 %v400
    %v402 = vand.u32 %v99, 4294901760
    %403 = vmatpush.msra.mxu0 %v402
    %v404 = vand.u32 %v98, 4294901760
    %405 = vmatpush.msra.mxu0 %v404
    %v406 = vand.u32 %v377, 4294901760
    %v407 = vsub.f32 %v377, %v406
    %v408 = vand.u32 %v407, 4294901760
    %v409 = vsub.f32 %v407, %v408
    %v410 = vand.u32 %v409, 4294901760
    %411 = vmatmul.f32.gmra.mxu0 %v410
    %v412 = vpop.f32.mrf.mxu0
    %v413 = vadd.f32 0.0, %v412
    %v414 = vand.u32 %v380, 4294901760
    %v415 = vsub.f32 %v380, %v414
    %v416 = vand.u32 %v415, 4294901760
    %v417 = vsub.f32 %v415, %v416
    %v418 = vand.u32 %v417, 4294901760
    %419 = vmatmul.f32.gmra.mxu0 %v418
    %v420 = vpop.f32.mrf.mxu0
    %v421 = vadd.f32 0.0, %v420
    %422 = vdwg.mxu0
    %423 = vmatpush.msra.mxu0 0.0
    %424 = vmatpush.msra.mxu0 0.0
    %425 = vmatpush.msra.mxu0 0.0
    %426 = vmatpush.msra.mxu0 0.0
    %427 = vmatpush.msra.mxu0 0.0
    %428 = vmatpush.msra.mxu0 0.0
    %429 = vmatpush.msra.mxu0 0.0
    %430 = vmatpush.msra.mxu0 0.0
    %v431 = vand.u32 %v105, 4294901760
    %v432 = vsub.f32 %v105, %v431
    %v433 = vand.u32 %v432, 4294901760
    %v434 = vsub.f32 %v432, %v433
    %v435 = vand.u32 %v434, 4294901760
    %436 = vmatpush.msra.mxu0 %v435
    %v437 = vand.u32 %v104, 4294901760
    %v438 = vsub.f32 %v104, %v437
    %v439 = vand.u32 %v438, 4294901760
    %v440 = vsub.f32 %v438, %v439
    %v441 = vand.u32 %v440, 4294901760
    %442 = vmatpush.msra.mxu0 %v441
    %v443 = vand.u32 %v103, 4294901760
    %v444 = vsub.f32 %v103, %v443
    %v445 = vand.u32 %v444, 4294901760
    %v446 = vsub.f32 %v444, %v445
    %v447 = vand.u32 %v446, 4294901760
    %448 = vmatpush.msra.mxu0 %v447
    %v449 = vand.u32 %v102, 4294901760
    %v450 = vsub.f32 %v102, %v449
    %v451 = vand.u32 %v450, 4294901760
    %v452 = vsub.f32 %v450, %v451
    %v453 = vand.u32 %v452, 4294901760
    %454 = vmatpush.msra.mxu0 %v453
    %v455 = vand.u32 %v101, 4294901760
    %v456 = vsub.f32 %v101, %v455
    %v457 = vand.u32 %v456, 4294901760
    %v458 = vsub.f32 %v456, %v457
    %v459 = vand.u32 %v458, 4294901760
    %460 = vmatpush.msra.mxu0 %v459
    %v461 = vand.u32 %v100, 4294901760
    %v462 = vsub.f32 %v100, %v461
    %v463 = vand.u32 %v462, 4294901760
    %v464 = vsub.f32 %v462, %v463
    %v465 = vand.u32 %v464, 4294901760
    %466 = vmatpush.msra.mxu0 %v465
    %v467 = vand.u32 %v99, 4294901760
    %v468 = vsub.f32 %v99, %v467
    %v469 = vand.u32 %v468, 4294901760
    %v470 = vsub.f32 %v468, %v469
    %v471 = vand.u32 %v470, 4294901760
    %472 = vmatpush.msra.mxu0 %v471
    %v473 = vand.u32 %v98, 4294901760
    %v474 = vsub.f32 %v98, %v473
    %v475 = vand.u32 %v474, 4294901760
    %v476 = vsub.f32 %v474, %v475
    %v477 = vand.u32 %v476, 4294901760
    %478 = vmatpush.msra.mxu0 %v477
    %v479 = vand.u32 %v377, 4294901760
    %480 = vmatmul.f32.gmra.mxu0 %v479
    %v481 = vpop.f32.mrf.mxu0
    %v482 = vadd.f32 %v413, %v481
    %v483 = vand.u32 %v380, 4294901760
    %484 = vmatmul.f32.gmra.mxu0 %v483
    %v485 = vpop.f32.mrf.mxu0
    %v486 = vadd.f32 %v421, %v485
    %487 = vdwg.mxu0
    %488 = vmatpush.msra.mxu0 0.0
    %489 = vmatpush.msra.mxu0 0.0
    %490 = vmatpush.msra.mxu0 0.0
    %491 = vmatpush.msra.mxu0 0.0
    %492 = vmatpush.msra.mxu0 0.0
    %493 = vmatpush.msra.mxu0 0.0
    %494 = vmatpush.msra.mxu0 0.0
    %495 = vmatpush.msra.mxu0 0.0
    %v496 = vand.u32 %v105, 4294901760
    %v497 = vsub.f32 %v105, %v496
    %498 = vmatpush.msra.mxu0 %v497
    %v499 = vand.u32 %v104, 4294901760
    %v500 = vsub.f32 %v104, %v499
    %501 = vmatpush.msra.mxu0 %v500
    %v502 = vand.u32 %v103, 4294901760
    %v503 = vsub.f32 %v103, %v502
    %504 = vmatpush.msra.mxu0 %v503
    %v505 = vand.u32 %v102, 4294901760
    %v506 = vsub.f32 %v102, %v505
    %507 = vmatpush.msra.mxu0 %v506
    %v508 = vand.u32 %v101, 4294901760
    %v509 = vsub.f32 %v101, %v508
    %510 = vmatpush.msra.mxu0 %v509
    %v511 = vand.u32 %v100, 4294901760
    %v512 = vsub.f32 %v100, %v511
    %513 = vmatpush.msra.mxu0 %v512
    %v514 = vand.u32 %v99, 4294901760
    %v515 = vsub.f32 %v99, %v514
    %516 = vmatpush.msra.mxu0 %v515
    %v517 = vand.u32 %v98, 4294901760
    %v518 = vsub.f32 %v98, %v517
    %519 = vmatpush.msra.mxu0 %v518
    %v520 = vand.u32 %v377, 4294901760
    %v521 = vsub.f32 %v377, %v520
    %522 = vmatmul.f32.gmra.mxu0 %v521
    %v523 = vpop.f32.mrf.mxu0
    %v524 = vadd.f32 %v482, %v523
    %v525 = vand.u32 %v380, 4294901760
    %v526 = vsub.f32 %v380, %v525
    %527 = vmatmul.f32.gmra.mxu0 %v526
    %v528 = vpop.f32.mrf.mxu0
    %v529 = vadd.f32 %v486, %v528
    %530 = vdwg.mxu0
    %531 = vmatpush.msra.mxu0 0.0
    %532 = vmatpush.msra.mxu0 0.0
    %533 = vmatpush.msra.mxu0 0.0
    %534 = vmatpush.msra.mxu0 0.0
    %535 = vmatpush.msra.mxu0 0.0
    %536 = vmatpush.msra.mxu0 0.0
    %537 = vmatpush.msra.mxu0 0.0
    %538 = vmatpush.msra.mxu0 0.0
    %v539 = vand.u32 %v105, 4294901760
    %540 = vmatpush.msra.mxu0 %v539
    %v541 = vand.u32 %v104, 4294901760
    %542 = vmatpush.msra.mxu0 %v541
    %v543 = vand.u32 %v103, 4294901760
    %544 = vmatpush.msra.mxu0 %v543
    %v545 = vand.u32 %v102, 4294901760
    %546 = vmatpush.msra.mxu0 %v545
    %v547 = vand.u32 %v101, 4294901760
    %548 = vmatpush.msra.mxu0 %v547
    %v549 = vand.u32 %v100, 4294901760
    %550 = vmatpush.msra.mxu0 %v549
    %v551 = vand.u32 %v99, 4294901760
    %552 = vmatpush.msra.mxu0 %v551
    %v553 = vand.u32 %v98, 4294901760
    %554 = vmatpush.msra.mxu0 %v553
    %v555 = vand.u32 %v377, 4294901760
    %v556 = vsub.f32 %v377, %v555
    %v557 = vand.u32 %v556, 4294901760
    %558 = vmatmul.f32.gmra.mxu0 %v557
    %v559 = vpop.f32.mrf.mxu0
    %v560 = vadd.f32 %v524, %v559
    %v561 = vand.u32 %v380, 4294901760
    %v562 = vsub.f32 %v380, %v561
    %v563 = vand.u32 %v562, 4294901760
    %564 = vmatmul.f32.gmra.mxu0 %v563
    %v565 = vpop.f32.mrf.mxu0
    %v566 = vadd.f32 %v529, %v565
    %567 = vdwg.mxu0
    %568 = vmatpush.msra.mxu0 0.0
    %569 = vmatpush.msra.mxu0 0.0
    %570 = vmatpush.msra.mxu0 0.0
    %571 = vmatpush.msra.mxu0 0.0
    %572 = vmatpush.msra.mxu0 0.0
    %573 = vmatpush.msra.mxu0 0.0
    %574 = vmatpush.msra.mxu0 0.0
    %575 = vmatpush.msra.mxu0 0.0
    %v576 = vand.u32 %v105, 4294901760
    %v577 = vsub.f32 %v105, %v576
    %v578 = vand.u32 %v577, 4294901760
    %579 = vmatpush.msra.mxu0 %v578
    %v580 = vand.u32 %v104, 4294901760
    %v581 = vsub.f32 %v104, %v580
    %v582 = vand.u32 %v581, 4294901760
    %583 = vmatpush.msra.mxu0 %v582
    %v584 = vand.u32 %v103, 4294901760
    %v585 = vsub.f32 %v103, %v584
    %v586 = vand.u32 %v585, 4294901760
    %587 = vmatpush.msra.mxu0 %v586
    %v588 = vand.u32 %v102, 4294901760
    %v589 = vsub.f32 %v102, %v588
    %v590 = vand.u32 %v589, 4294901760
    %591 = vmatpush.msra.mxu0 %v590
    %v592 = vand.u32 %v101, 4294901760
    %v593 = vsub.f32 %v101, %v592
    %v594 = vand.u32 %v593, 4294901760
    %595 = vmatpush.msra.mxu0 %v594
    %v596 = vand.u32 %v100, 4294901760
    %v597 = vsub.f32 %v100, %v596
    %v598 = vand.u32 %v597, 4294901760
    %599 = vmatpush.msra.mxu0 %v598
    %v600 = vand.u32 %v99, 4294901760
    %v601 = vsub.f32 %v99, %v600
    %v602 = vand.u32 %v601, 4294901760
    %603 = vmatpush.msra.mxu0 %v602
    %v604 = vand.u32 %v98, 4294901760
    %v605 = vsub.f32 %v98, %v604
    %v606 = vand.u32 %v605, 4294901760
    %607 = vmatpush.msra.mxu0 %v606
    %v608 = vand.u32 %v377, 4294901760
    %609 = vmatmul.f32.gmra.mxu0 %v608
    %v610 = vpop.f32.mrf.mxu0
    %v611 = vadd.f32 %v560, %v610
    %v612 = vand.u32 %v380, 4294901760
    %613 = vmatmul.f32.gmra.mxu0 %v612
    %v614 = vpop.f32.mrf.mxu0
    %v615 = vadd.f32 %v566, %v614
    %616 = vdwg.mxu0
    %617 = vmatpush.msra.mxu0 0.0
    %618 = vmatpush.msra.mxu0 0.0
    %619 = vmatpush.msra.mxu0 0.0
    %620 = vmatpush.msra.mxu0 0.0
    %621 = vmatpush.msra.mxu0 0.0
    %622 = vmatpush.msra.mxu0 0.0
    %623 = vmatpush.msra.mxu0 0.0
    %624 = vmatpush.msra.mxu0 0.0
    %v625 = vand.u32 %v105, 4294901760
    %626 = vmatpush.msra.mxu0 %v625
    %v627 = vand.u32 %v104, 4294901760
    %628 = vmatpush.msra.mxu0 %v627
    %v629 = vand.u32 %v103, 4294901760
    %630 = vmatpush.msra.mxu0 %v629
    %v631 = vand.u32 %v102, 4294901760
    %632 = vmatpush.msra.mxu0 %v631
    %v633 = vand.u32 %v101, 4294901760
    %634 = vmatpush.msra.mxu0 %v633
    %v635 = vand.u32 %v100, 4294901760
    %636 = vmatpush.msra.mxu0 %v635
    %v637 = vand.u32 %v99, 4294901760
    %638 = vmatpush.msra.mxu0 %v637
    %v639 = vand.u32 %v98, 4294901760
    %640 = vmatpush.msra.mxu0 %v639
    %v641 = vand.u32 %v377, 4294901760
    %642 = vmatmul.f32.gmra.mxu0 %v641
    %v643 = vpop.f32.mrf.mxu0
    %v644 = vadd.f32 %v611, %v643
    %v645 = vand.u32 %v380, 4294901760
    %646 = vmatmul.f32.gmra.mxu0 %v645
    %v647 = vpop.f32.mrf.mxu0
    %v648 = vadd.f32 %v615, %v647
    %649 = vdwg.mxu0
    %v650 = vmul.f32 %v369, %v644
    %v651 = vmul.f32 %v373, %v648
    %v652 = vsel %vm152, %v650, 0.0
    %653 = vadd.xlane.f32.xlu0 %v652
    %v654 = vpop.xlane.xlu0 %653
    %v655 = vsel %vm152, %v651, 0.0
    %656 = vadd.xlane.f32.xlu0 %v655
    %v657 = vpop.xlane.xlu0 %656
    %v658 = vsub.f32 0.0, %v654
    %v659 = vsub.f32 0.0, %v657
    %v660 = vmax.f32 %v658, 0.0
    %v661 = vmax.f32 %v659, 0.0
    %v662 = vand.u32 2147483647, %v654
    %v663 = vand.u32 2147483647, %v657
    %v664 = vsub.f32 0.0, %v662
    %v665 = vsub.f32 0.0, %v663
    %v666 = vmul.f32 %v664, 1.442695
    %v667 = vpow.pop %v666
    %v668 = vmul.f32 %v665, 1.442695
    %v669 = vpow.pop %v668
    %v670 = vadd.f32 %v667, 1.0
    %v671 = vlog2.pop %v670
    %v672 = vmul.f32 %v671, 0.6931472
    %v673 = vmul.f32 -0.5, %v667
    %v674 = vadd.f32 %v673, 1.0
    %v675 = vmul.f32 %v674, %v667
    %v676 = vand.u32 2147483647, %v667
    %vm677 = vcmp.lt.f32.partialorder %v676, 0.0004427343
    %v678 = vsel %vm677, %v675, %v672
    %v679 = vadd.f32 %v669, 1.0
    %v680 = vlog2.pop %v679
    %v681 = vmul.f32 %v680, 0.6931472
    %v682 = vmul.f32 -0.5, %v669
    %v683 = vadd.f32 %v682, 1.0
    %v684 = vmul.f32 %v683, %v669
    %v685 = vand.u32 2147483647, %v669
    %vm686 = vcmp.lt.f32.partialorder %v685, 0.0004427343
    %v687 = vsel %vm686, %v684, %v681
    %v688 = vadd.f32 %v660, %v678
    %v689 = vadd.f32 %v661, %v687
    %v690 = vld [vmem:[#allocation2] sm:$0xff]
    %v691 = vld [vmem:[#allocation2 + $0x8] sm:$0xff]
    %v692 = vadd.f32 %v690, %v688
    %v693 = vadd.f32 %v691, %v689
    %vm694 = vcmask 7168
    %695 = vst.msk [vmem:[#allocation2] sm:$0xff] %vm694, %v692
    %696 = vst.msk [vmem:[#allocation2 + $0x8] sm:$0xff] %vm694, %v693
    // Predicated region
    $region26: #{tpu_custom_call.1} parent=1 // pred_check
      %p697 = pneg %p87
    $region27: #{tpu_custom_call.1} parent=1 // pred_check_branch
      %699 = sbr.rel (%p697) target = $region29
    $region28: #{tpu_custom_call.1} parent=1 // pred_region
      %v700 = vld [vmem:[#allocation2] sm:$0xff]
      %v701 = vld [vmem:[#allocation2 + $0x8] sm:$0xff]
      %v702 = vsel %vm694, %v700, 0.0
      %v703 = vsel %vm694, %v701, 0.0
      %v704 = vadd.f32 %v702, %v703
      %705 = vadd.xlane.f32.xlu0 %v704
      %v706 = vpop.xlane.xlu0 %705
      %v707 = vrot.slane %v706, 4
      %v708 = vadd.f32 %v706, %v707
      %v709 = vrot.slane %v708, 2
      %v710 = vadd.f32 %v708, %v709
      %v711 = vrot.slane %v710, 1
      %v712 = vadd.f32 %v710, %v711
      %s713 = vtos %v712
      %v714 = vstv %s713
      %715 = vst [vmem:[#allocation3] sm:$0xff] %v714
    $region29: #{tpu_custom_call.1} parent=1 // pred_fallthru
      _
    // Predicated region
    $region30: #{tpu_custom_call.1} parent=1 // pred_check
      _
    $region31: #{tpu_custom_call.1} parent=1 // pred_check_branch
      %717 = sbr.rel (0) target = $region33
    $region32: #{tpu_custom_call.1} parent=1 // pred_region
      %719 = vsyncadd [#allocation4], 0
      %s721 = sshll.u32 [#allocation3], 4
      %s722 = int_to_ptr.vmem [resolvable:$true] %s721
      %s723 = sshll.u32 %s5, 4
      %s724 = int_to_ptr.hbm [resolvable:$true] %s723
      %726 = dma.vmem_to_hbm [thread:$0]  %s722, 128, %s724, [#allocation4]
    $region33: #{tpu_custom_call.1} parent=1 // pred_fallthru
      _
    // Predicated region
    $region34: #{tpu_custom_call.1} parent=1 // pred_check
      _
    $region35: #{tpu_custom_call.1} parent=1 // pred_check_branch
      %728 = sbr.rel (0) target = $region37
    $region36: #{tpu_custom_call.1} parent=1 // pred_region
      %730 = dma.done [#allocation4], 128
    $region37: #{tpu_custom_call.1} parent=1 // pred_fallthru
      _
    %731 = vsyncpa [#allocation4], 1

</llo_original>
